<compile_context>
chip_gen: v7x
topology: tpu7x:2x2x1
jax: 0.10.0
libtpu: 0.0.40
codegen_flags: <defaults>
</compile_context>

<pallas_src>
import functools
import math

import jax
import jax.numpy as jnp
from jax.experimental import pallas as pl
from jax.experimental.pallas import tpu as pltpu


_MIB = 1024 * 1024
_MIN_STEPS = 4          # >= 2 grid steps per TensorCore on v7x; ~free elsewhere


def _cdiv(a, b):
    return -(-a // b)


def _round_up(x, m):
    return _cdiv(x, m) * m


@functools.lru_cache(maxsize=None)
def _vmem_limit_bytes():
    """Generation-aware scoped-VMEM limit (~70% of per-core VMEM)."""
    cap = 64 * _MIB                      # conservative default (v7x per-TC VMEM)
    try:
        cap = int(pltpu.get_tpu_info().vmem_capacity_bytes)
    except Exception:
        pass
    return max(32 * _MIB, min(int(cap * 0.70), 100 * _MIB))


def _tile_budget_bytes():
    # Byte budget for the pipelined I/O buffers + in-kernel f32 temporaries.
    # Capped at 48 MiB so a tile sized on a 128 MiB chip (v5e/v6e) still fits
    # v7x's 64 MiB per-core VMEM; multi-MiB DMA blocks already reach the HBM
    # roofline on all three generations.
    return int(min(_vmem_limit_bytes(), 48 * _MIB) * 0.85)


def _per_elem_bytes(itemsize):
    # 2x double-buffered input + 2x output tiles in the I/O dtype, plus one
    # live full-tile f32 value and one transient (x*x / fused output expr).
    return 4 * itemsize + 8


def _limit_tile_for_steps(total, tile, align, target):
    """Shrink `tile` so the grid gets >= `target` steps when the data allows."""
    max_steps = max(total // align, 1)
    want = min(target, max_steps)
    if want > 1:
        tile = min(tile, _round_up(_cdiv(total, want), align))
    return max(tile, align)


# ---------------------------------------------------------------------------
# Kernel bodies
# ---------------------------------------------------------------------------

def _ln_lane_packed_kernel(x_ref, w_ref, b_ref, er_ref, ee_ref, o_ref, *, c, eps):
    """channels_last, lane-packed: k logical rows per VMEM row.

    x:(T, k*C) | w,b:(1, k*C) (weight tiled k times) | er:(k*C, k) one-hot
    segment-reduce matrix | ee:(k, k*C) = er.T segment-expand matrix.
    Segmented mean / E[x^2] run on the MXU; all I/O is lane-dense.
    """
    x = x_ref[...].astype(jnp.float32)                 # single live f32 tile
    er = er_ref[...]
    inv_c = jnp.float32(1.0 / c)
    mean = jnp.dot(x, er, preferred_element_type=jnp.float32) * inv_c      # (T,k)
    mean_sq = jnp.dot(x * x, er, preferred_element_type=jnp.float32) * inv_c
    var = mean_sq - mean * mean                        # biased variance
    inv = jax.lax.rsqrt(var + eps)
    ee = ee_ref[...]
    mean_b = jnp.dot(mean, ee, preferred_element_type=jnp.float32)         # (T,k*C)
    inv_b = jnp.dot(inv, ee, preferred_element_type=jnp.float32)
    w = w_ref[...].astype(jnp.float32)
    b = b_ref[...].astype(jnp.float32)
    o_ref[...] = ((x - mean_b) * inv_b * w + b).astype(o_ref.dtype)


def _ln_lane_kernel(x_ref, w_ref, b_ref, o_ref, *, eps):
    """channels_last fallback: normalize over the last (lane) axis."""
    x = x_ref[...].astype(jnp.float32)                 # single live f32 tile
    mean = jnp.mean(x, axis=-1, keepdims=True)
    mean_sq = jnp.mean(x * x, axis=-1, keepdims=True)
    inv = jax.lax.rsqrt(mean_sq - mean * mean + eps)   # biased variance
    w = w_ref[...].astype(jnp.float32)
    b = b_ref[...].astype(jnp.float32)
    o_ref[...] = ((x - mean) * inv * w + b).astype(o_ref.dtype)


def _ln_sublane_kernel(x_ref, w_ref, b_ref, o_ref, *, eps):
    """channels_first: normalize over the channel (sublane) axis.

    x:(1, C, T) with H*W on the lane axis (lane-dense for any C).
    w,b:(1, C, 1) resident; the in-register lane broadcast is negligible for
    this HBM-bound kernel (a full-width pre-broadcast would cost extra HBM).
    """
    x = x_ref[...].astype(jnp.float32)                 # single live f32 tile
    mean = jnp.mean(x, axis=-2, keepdims=True)
    mean_sq = jnp.mean(x * x, axis=-2, keepdims=True)
    inv = jax.lax.rsqrt(mean_sq - mean * mean + eps)   # biased variance
    w = w_ref[...].astype(jnp.float32)
    b = b_ref[...].astype(jnp.float32)
    o_ref[...] = ((x - mean) * inv * w + b).astype(o_ref.dtype)


# ---------------------------------------------------------------------------
# Wrappers
# ---------------------------------------------------------------------------

def _layer_norm_channels_last(x, weight, bias, eps):
    c = x.shape[-1]
    rows = math.prod(x.shape[:-1]) if x.ndim > 1 else 1
    itemsize = jnp.dtype(x.dtype).itemsize
    budget = _tile_budget_bytes()
    per_elem = _per_elem_bytes(itemsize)
    vmem_limit = _vmem_limit_bytes()

    k = 128 // math.gcd(c, 128)        # logical rows packed per lane-row
    width = k * c                      # multiple of 128 -> lane-dense I/O
    packable = (rows % k == 0) and (8 * width * per_elem <= budget)

    if packable:
        x2 = x.reshape(rows // k, width)      # contiguous reshape, no HBM pass
        r = x2.shape[0]
        tile = max((budget // (width * per_elem)) // 8 * 8, 8)
        tile = min(tile, _round_up(r, 8))
        tile = _limit_tile_for_steps(r, tile, 8, _MIN_STEPS)
        grid = _cdiv(r, tile)

        w2 = jnp.tile(weight.reshape(-1), k).reshape(1, width)
        b2 = jnp.tile(bias.reshape(-1), k).reshape(1, width)
        seg = jnp.arange(width, dtype=jnp.int32) // c
        er = (seg[:, None] == jnp.arange(k, dtype=jnp.int32)[None, :]
              ).astype(jnp.float32)                     # (width, k)
        ee = jnp.asarray(er.T)                          # (k, width)

        out = pl.pallas_call(
            functools.partial(_ln_lane_packed_kernel, c=c, eps=eps),
            out_shape=jax.ShapeDtypeStruct((r, width), x.dtype),
            grid_spec=pltpu.PrefetchScalarGridSpec(
                num_scalar_prefetch=0,
                grid=(grid,),
                in_specs=[
                    pl.BlockSpec((tile, width), lambda i: (i, 0)),
                    pl.BlockSpec((1, width), lambda i: (0, 0)),
                    pl.BlockSpec((1, width), lambda i: (0, 0)),
                    pl.BlockSpec((width, k), lambda i: (0, 0)),
                    pl.BlockSpec((k, width), lambda i: (0, 0)),
                ],
                out_specs=pl.BlockSpec((tile, width), lambda i: (i, 0)),
            ),
            compiler_params=pltpu.CompilerParams(
                dimension_semantics=("parallel",),
                vmem_limit_bytes=vmem_limit),
            cost_estimate=pl.CostEstimate(
                flops=2 * rows * c * (6 + 2 * k),
                transcendentals=rows,
                bytes_accessed=2 * rows * c * itemsize),
        )(x2, w2, b2, er, ee)
        return out.reshape(x.shape)

    # Fallback (rows not divisible by k, or one 8-row packed block would not
    # fit the VMEM budget): lane-masked but correct.
    # TODO(synk): two-pass reduction fallback for C so large that even an
    # (8, C) block exceeds the VMEM budget.
    x2 = x.reshape(rows, c)
    c_pad = _round_up(c, 128)
    tile = max((budget // (c_pad * per_elem)) // 8 * 8, 8)
    tile = min(tile, _round_up(rows, 8))
    tile = _limit_tile_for_steps(rows, tile, 8, _MIN_STEPS)
    grid = _cdiv(rows, tile)

    out = pl.pallas_call(
        functools.partial(_ln_lane_kernel, eps=eps),
        out_shape=jax.ShapeDtypeStruct((rows, c), x.dtype),
        grid_spec=pltpu.PrefetchScalarGridSpec(
            num_scalar_prefetch=0,
            grid=(grid,),
            in_specs=[
                pl.BlockSpec((tile, c), lambda i: (i, 0)),
                pl.BlockSpec((1, c), lambda i: (0, 0)),
                pl.BlockSpec((1, c), lambda i: (0, 0)),
            ],
            out_specs=pl.BlockSpec((tile, c), lambda i: (i, 0)),
        ),
        compiler_params=pltpu.CompilerParams(
            dimension_semantics=("parallel",),
            vmem_limit_bytes=vmem_limit),
        cost_estimate=pl.CostEstimate(
            flops=10 * rows * c,
            transcendentals=rows,
            bytes_accessed=2 * rows * c * itemsize),
    )(x2, weight.reshape(1, c), bias.reshape(1, c))
    return out.reshape(x.shape)


def _layer_norm_channels_first(x, weight, bias, eps):
    n, c = x.shape[0], x.shape[1]
    hw = math.prod(x.shape[2:]) if x.ndim > 2 else 1
    x3 = x.reshape(n, c, hw)                      # contiguous reshape, no HBM pass
    itemsize = jnp.dtype(x.dtype).itemsize
    budget = _tile_budget_bytes()
    per_elem = _per_elem_bytes(itemsize)

    # TODO(synk): no fallback for C so large that a (1, C, 128) block exceeds
    # the VMEM budget (would need a two-pass channel reduction).
    tile_hw = max((budget // (c * per_elem)) // 128 * 128, 128)
    tile_hw = min(tile_hw, _round_up(hw, 128))
    tile_hw = _limit_tile_for_steps(hw, tile_hw, 128, _cdiv(_MIN_STEPS, n))
    grid = (n, _cdiv(hw, tile_hw))

    out = pl.pallas_call(
        functools.partial(_ln_sublane_kernel, eps=eps),
        out_shape=jax.ShapeDtypeStruct((n, c, hw), x.dtype),
        grid_spec=pltpu.PrefetchScalarGridSpec(
            num_scalar_prefetch=0,
            grid=grid,
            in_specs=[
                pl.BlockSpec((1, c, tile_hw), lambda i, j: (i, 0, j)),
                pl.BlockSpec((1, c, 1), lambda i, j: (0, 0, 0)),
                pl.BlockSpec((1, c, 1), lambda i, j: (0, 0, 0)),
            ],
            out_specs=pl.BlockSpec((1, c, tile_hw), lambda i, j: (i, 0, j)),
        ),
        compiler_params=pltpu.CompilerParams(
            dimension_semantics=("parallel", "parallel"),
            vmem_limit_bytes=_vmem_limit_bytes()),
        cost_estimate=pl.CostEstimate(
            flops=10 * n * c * hw,
            transcendentals=n * hw,
            bytes_accessed=2 * n * c * hw * itemsize),
    )(x3, weight.reshape(1, c, 1), bias.reshape(1, c, 1))
    return out.reshape(x.shape)


def layer_norm(x, weight, bias, eps=1e-6, data_format="channels_last"):
    """Pallas equivalent of the PyTorch LayerNorm module's forward pass."""
    if data_format not in ("channels_last", "channels_first"):
        raise NotImplementedError
    if data_format == "channels_last":
        return _layer_norm_channels_last(x, weight, bias, eps)
    return _layer_norm_channels_first(x, weight, bias, eps)


# ---------------------------------------------------------------------------
# References + self-test
# ---------------------------------------------------------------------------

def _reference_channels_first(x, weight, bias, eps):
    u = jnp.mean(x, axis=1, keepdims=True)
    s = jnp.mean((x - u) ** 2, axis=1, keepdims=True)
    xn = (x - u) / jnp.sqrt(s + eps)
    return weight[None, :, None, None] * xn + bias[None, :, None, None]


def _reference_channels_last(x, weight, bias, eps):
    u = jnp.mean(x, axis=-1, keepdims=True)
    s = jnp.mean((x - u) ** 2, axis=-1, keepdims=True)
    return (x - u) / jnp.sqrt(s + eps) * weight + bias


if __name__ == "__main__":
    key = jax.random.PRNGKey(0)
    kx, kw, kb, k2, k3 = jax.random.split(key, 5)
    eps = 1e-6

    # Main spec-consistent shape: NCHW (2, 4, 16, 16).
    n, c, h, w = 2, 4, 16, 16
    x = jax.random.normal(kx, (n, c, h, w), dtype=jnp.float32)

    w_init = jnp.ones((c,), dtype=jnp.float32)      # module __init__ params
    b_init = jnp.zeros((c,), dtype=jnp.float32)
    w_rand = jax.random.normal(kw, (c,), dtype=jnp.float32)
    b_rand = jax.random.normal(kb, (c,), dtype=jnp.float32)

    for weight, bias in ((w_init, b_init), (w_rand, b_rand)):
        # channels_first (NCHW, normalize over channels).
        out_cf = layer_norm(x, weight, bias, eps=eps,
                            data_format="channels_first")
        out_cf = jax.block_until_ready(out_cf)
        ref_cf = _reference_channels_first(x, weight, bias, eps)
        assert jnp.allclose(out_cf, ref_cf, atol=1e-5, rtol=1e-5)

        # channels_last (NHWC, lane-packed path since C=4, rows % k == 0).
        x_cl = jnp.transpose(x, (0, 2, 3, 1))
        out_cl = layer_norm(x_cl, weight, bias, eps=eps,
                            data_format="channels_last")
        out_cl = jax.block_until_ready(out_cl)
        ref_cl = jnp.transpose(ref_cf, (0, 2, 3, 1))
        assert jnp.allclose(out_cl, ref_cl, atol=1e-5, rtol=1e-5)

    # channels_last fallback path (rows=10 not divisible by k=32).
    x_small = jax.random.normal(k2, (2, 5, 4), dtype=jnp.float32)
    out_s = jax.block_until_ready(
        layer_norm(x_small, w_rand, b_rand, eps=eps, data_format="channels_last"))
    assert jnp.allclose(out_s, _reference_channels_last(x_small, w_rand, b_rand, eps),
                        atol=1e-5, rtol=1e-5)

    # channels_last with C a multiple of 128 (packed path with k=1).
    c2 = 128
    x_big_c = jax.random.normal(k3, (2, 8, c2), dtype=jnp.float32)
    w2 = jnp.ones((c2,), dtype=jnp.float32) * 1.5
    b2 = jnp.ones((c2,), dtype=jnp.float32) * 0.25
    out_b = jax.block_until_ready(
        layer_norm(x_big_c, w2, b2, eps=eps, data_format="channels_last"))
    assert jnp.allclose(out_b, _reference_channels_last(x_big_c, w2, b2, eps),
                        atol=1e-5, rtol=1e-5)

    print("KERNEL_OK")
</pallas_src>

<mosaic_0001>
module attributes {stable_mosaic.version = 11 : i64} {
  func.func @_ln_sublane_kernel(%arg0: i32, %arg1: i32, %arg2: memref<1x4x128xf32, #tpu.memory_space<vmem>>, %arg3: memref<1x4x1xf32, #tpu.memory_space<vmem>>, %arg4: memref<1x4x1xf32, #tpu.memory_space<vmem>>, %arg5: memref<1x4x128xf32, #tpu.memory_space<vmem>>) attributes {dimension_semantics = [#tpu.dimension_semantics<parallel>, #tpu.dimension_semantics<parallel>], iteration_bounds = array<i64: 2, 2>, scalar_prefetch = 0 : i64, scratch_operands = 0 : i64, tpu.core_type = #tpu.core_type<tc>, window_params = [{transform_indices = @transform_0, window_bounds = array<i64: 1, 4, 128>}, {pipeline_mode = #tpu.pipeline_mode<synchronous>, transform_indices = @transform_1, window_bounds = array<i64: 1, 4, 1>}, {pipeline_mode = #tpu.pipeline_mode<synchronous>, transform_indices = @transform_2, window_bounds = array<i64: 1, 4, 1>}, {transform_indices = @transform_3, window_bounds = array<i64: 1, 4, 128>}]} {
    %c0 = arith.constant 0 : index
    %c0_0 = arith.constant 0 : index
    %c0_1 = arith.constant 0 : index
    %0 = vector.load %arg2[%c0, %c0_0, %c0_1] : memref<1x4x128xf32, #tpu.memory_space<vmem>>, vector<1x4x128xf32>
    %cst = arith.constant dense<0.000000e+00> : vector<1x128xf32>
    %1 = vector.multi_reduction <add>, %0, %cst [1] : vector<1x4x128xf32> to vector<1x128xf32>
    %2 = vector.shape_cast %1 : vector<1x128xf32> to vector<1x1x128xf32>
    %cst_2 = arith.constant 4.000000e+00 : f32
    %3 = vector.broadcast %cst_2 : f32 to vector<1x1x128xf32>
    %4 = arith.divf %2, %3 : vector<1x1x128xf32>
    %5 = arith.mulf %0, %0 : vector<1x4x128xf32>
    %cst_3 = arith.constant dense<0.000000e+00> : vector<1x128xf32>
    %6 = vector.multi_reduction <add>, %5, %cst_3 [1] : vector<1x4x128xf32> to vector<1x128xf32>
    %7 = vector.shape_cast %6 : vector<1x128xf32> to vector<1x1x128xf32>
    %cst_4 = arith.constant 4.000000e+00 : f32
    %8 = vector.broadcast %cst_4 : f32 to vector<1x1x128xf32>
    %9 = arith.divf %7, %8 : vector<1x1x128xf32>
    %10 = arith.mulf %4, %4 : vector<1x1x128xf32>
    %11 = arith.subf %9, %10 : vector<1x1x128xf32>
    %cst_5 = arith.constant 9.99999997E-7 : f32
    %12 = vector.broadcast %cst_5 : f32 to vector<1x1x128xf32>
    %13 = arith.addf %11, %12 : vector<1x1x128xf32>
    %14 = math.rsqrt %13 : vector<1x1x128xf32>
    %c0_6 = arith.constant 0 : index
    %c0_7 = arith.constant 0 : index
    %c0_8 = arith.constant 0 : index
    %15 = vector.load %arg3[%c0_6, %c0_7, %c0_8] : memref<1x4x1xf32, #tpu.memory_space<vmem>>, vector<1x4x1xf32>
    %c0_9 = arith.constant 0 : index
    %c0_10 = arith.constant 0 : index
    %c0_11 = arith.constant 0 : index
    %16 = vector.load %arg4[%c0_9, %c0_10, %c0_11] : memref<1x4x1xf32, #tpu.memory_space<vmem>>, vector<1x4x1xf32>
    %17 = vector.broadcast %4 : vector<1x1x128xf32> to vector<1x4x128xf32>
    %18 = arith.subf %0, %17 : vector<1x4x128xf32>
    %19 = vector.broadcast %14 : vector<1x1x128xf32> to vector<1x4x128xf32>
    %20 = arith.mulf %18, %19 : vector<1x4x128xf32>
    %21 = vector.broadcast %15 : vector<1x4x1xf32> to vector<1x4x128xf32>
    %22 = arith.mulf %20, %21 : vector<1x4x128xf32>
    %23 = vector.broadcast %16 : vector<1x4x1xf32> to vector<1x4x128xf32>
    %24 = arith.addf %22, %23 : vector<1x4x128xf32>
    %c0_12 = arith.constant 0 : index
    %c0_13 = arith.constant 0 : index
    %c0_14 = arith.constant 0 : index
    %25 = vector.load %arg5[%c0_12, %c0_13, %c0_14] : memref<1x4x128xf32, #tpu.memory_space<vmem>>, vector<1x4x128xf32>
    tpu.vector_store %arg5[%c0_12, %c0_13, %c0_14], %24 {strides = array<i32>} : memref<1x4x128xf32, #tpu.memory_space<vmem>>, vector<1x4x128xf32>,
    return
  }
  func.func @transform_0(%arg0: i32, %arg1: i32) -> (i32, i32, i32) {
    %c0_i32 = arith.constant 0 : i32
    %c0_i32_0 = arith.constant 0 : i32
    return %arg0, %c0_i32, %arg1 : i32, i32, i32
  }
  func.func @transform_1(%arg0: i32, %arg1: i32) -> (i32, i32, i32) {
    %c0_i32 = arith.constant 0 : i32
    %c0_i32_0 = arith.constant 0 : i32
    %c0_i32_1 = arith.constant 0 : i32
    %c0_i32_2 = arith.constant 0 : i32
    return %c0_i32, %c0_i32_0, %c0_i32_1 : i32, i32, i32
  }
  func.func @transform_2(%arg0: i32, %arg1: i32) -> (i32, i32, i32) {
    %c0_i32 = arith.constant 0 : i32
    %c0_i32_0 = arith.constant 0 : i32
    %c0_i32_1 = arith.constant 0 : i32
    %c0_i32_2 = arith.constant 0 : i32
    return %c0_i32, %c0_i32_0, %c0_i32_1 : i32, i32, i32
  }
  func.func @transform_3(%arg0: i32, %arg1: i32) -> (i32, i32, i32) {
    %c0_i32 = arith.constant 0 : i32
    %c0_i32_0 = arith.constant 0 : i32
    return %arg0, %c0_i32, %arg1 : i32, i32, i32
  }
}

</mosaic_0001>

<llo_original>
// kernel: tpu_custom_call.1
$region0: #{tpu_custom_call.1}
  #allocation0 [shape = 'u32[]', space=smem, size = 0x4, offset = 0x4, fixed_abs, tag = 'smem constant byte address 0x4 - core index']
  #allocation1 [shape = 'u32[144,128]{1,0:T(1,128)}', space=vmem, size = 0x12000, scoped, tag = 'internal scratch']
  %s0 = inlined_call_operand.hbm [shape: f32[2,4,256], index: 0, kind: input, shape index: {}]
  %s1 = inlined_call_operand.vmem [shape: f32[1,4,1], index: 1, kind: input, shape index: {}]
  %s2 = inlined_call_operand.vmem [shape: f32[1,4,1], index: 2, kind: input, shape index: {}]
  %s3 = inlined_call_operand.hbm [shape: f32[2,4,256], index: 3, kind: output, shape index: {}]
  %s4 = sld [smem:[#allocation0]]
  $region49: #{tpu_custom_call.1} parent=0
    _
  %s6 = ssub.s32 1, %s4
  %s7 = scalar_select 0, %s6, %s4
  $region1: #{tpu_custom_call.1} parent=0
    #allocation2 [shape = 'u8[4096]{0}', space=vmem, size = 0x1000, scoped, tag = 'input window, operand 0']
    #allocation3 [shape = 's32[2]{0}', space=sflag, size = 0x8, scoped, tag = 'scoped memory for tpu_custom_call.1']
    #allocation4 [shape = 's32[2]{0}', space=sflag, size = 0x8, scoped, tag = 'scoped memory for tpu_custom_call.1']
    #allocation5 [shape = 'u8[4096]{0}', space=vmem, size = 0x1000, scoped, tag = 'output window, operand 0']
    %8 = vsyncpa [#allocation3], 0
    %s9 = scalar_lea.sflag [#allocation3], 1
    %10 = vsyncpa %s9, 0
    %11 = vsyncpa [#allocation4], 0
    %s12 = scalar_lea.sflag [#allocation4], 1
    %13 = vsyncpa %s12, 0
    loop: start=0, step=1, limit=6
    $region2: #{tpu_custom_call.1} parent=1 // loop_pre_header
      _
    $region3: #{tpu_custom_call.1} parent=1 // loop_header
      %s15 = sphi 0, %s19
      %p16 = scmp.ge.s32.totalorder %s15, 6
      %s22 = sphi 0, %s34
      %s23 = sphi 0, %s30
      %s24 = sphi 0, %s22
      %s25 = sphi 0, %s23
      %s26 = sphi 0, %s24
      %s27 = sphi 0, %s25
      %s39 = sphi 0, %s41
      %s42 = sphi 0, %s39
      %s43 = sphi 0, %s42
      %s59 = sphi 0, %s43
      %s63 = sphi 0, %s63
      %s65 = sphi 0, %s63
      %s66 = sphi 0, %s65
      %s80 = sphi 0, %s66
      %s84 = sphi 0, %s84
      %s86 = sphi 0, %s84
      %s87 = sphi 0, %s86
      %s101 = sphi 0, %s87
      %s109 = sphi 0, %s111
      %s112 = sphi 0, %s109
      %s113 = sphi 0, %s112
      %s129 = sphi 0, %s113
    $region4: #{tpu_custom_call.1} parent=1 // loop_header_branch
      %18 = sbr.rel (%p16) target = $region8
    $region5: #{tpu_custom_call.1} parent=1 // loop_body
      %s20 = ssub.s32 %s15, 1
      %s21 = ssub.s32 %s15, 2
      %s28 = sadd.s32 1, %s23
      %p29 = scmp.ge.s32.totalorder %s28, 2
      %s30 = scalar_select %p29, 0, %s28
      %s31 = sadd.s32 1, %s22
      %s32 = scalar_select %p29, %s31, %s22
      %p33 = scmp.ge.s32.totalorder %s32, 2
      %s34 = scalar_select %p33, 0, %s32
      %s35 = ssub.s32 %s22, %s34
      %s36 = ssub.s32 %s23, %s30
      %s37 = sor.u32 %s35, %s36
      %p38 = scmp.eq.s32.totalorder %s37, 0
      %s40 = sadd.s32 %s39, 1
      %s41 = scalar_select %p38, %s39, %s40
      %p44 = pneg %p38
      %p45 = scmp.eq.s32.totalorder %s15, 3
      %p46 = por %p44, %p45
      %p47 = scmp.ne.s32.totalorder %s39, %s42
      %p48 = scmp.eq.s32.totalorder %s15, 0
      %p49 = por %p47, %p48
      %p50 = scmp.ne.s32.totalorder %s39, %s42
      %p51 = scmp.eq.s32.totalorder %s20, 3
      %p52 = por %p50, %p51
      %p53 = scmp.ne.s32.totalorder %s42, %s43
      %p54 = scmp.eq.s32.totalorder %s20, 0
      %p55 = por %p53, %p54
      %p56 = scmp.ne.s32.totalorder %s42, %s43
      %p57 = scmp.eq.s32.totalorder %s21, 3
      %p58 = por %p56, %p57
      %p60 = scmp.ne.s32.totalorder %s43, %s59
      %p61 = scmp.eq.s32.totalorder %s21, 0
      %p62 = por %p60, %p61
      %s64 = sadd.s32 %s63, 1
      %p67 = scmp.eq.s32.totalorder %s15, 3
      %p68 = scmp.ne.s32.totalorder %s63, %s65
      %p69 = scmp.eq.s32.totalorder %s15, 0
      %p70 = por %p68, %p69
      %p71 = scmp.ne.s32.totalorder %s63, %s65
      %p72 = scmp.eq.s32.totalorder %s20, 3
      %p73 = por %p71, %p72
      %p74 = scmp.ne.s32.totalorder %s65, %s66
      %p75 = scmp.eq.s32.totalorder %s20, 0
      %p76 = por %p74, %p75
      %p77 = scmp.ne.s32.totalorder %s65, %s66
      %p78 = scmp.eq.s32.totalorder %s21, 3
      %p79 = por %p77, %p78
      %p81 = scmp.ne.s32.totalorder %s66, %s80
      %p82 = scmp.eq.s32.totalorder %s21, 0
      %p83 = por %p81, %p82
      %s85 = sadd.s32 %s84, 1
      %p88 = scmp.eq.s32.totalorder %s15, 3
      %p89 = scmp.ne.s32.totalorder %s84, %s86
      %p90 = scmp.eq.s32.totalorder %s15, 0
      %p91 = por %p89, %p90
      %p92 = scmp.ne.s32.totalorder %s84, %s86
      %p93 = scmp.eq.s32.totalorder %s20, 3
      %p94 = por %p92, %p93
      %p95 = scmp.ne.s32.totalorder %s86, %s87
      %p96 = scmp.eq.s32.totalorder %s20, 0
      %p97 = por %p95, %p96
      %p98 = scmp.ne.s32.totalorder %s86, %s87
      %p99 = scmp.eq.s32.totalorder %s21, 3
      %p100 = por %p98, %p99
      %p102 = scmp.ne.s32.totalorder %s87, %s101
      %p103 = scmp.eq.s32.totalorder %s21, 0
      %p104 = por %p102, %p103
      %s105 = ssub.s32 %s22, %s34
      %s106 = ssub.s32 %s23, %s30
      %s107 = sor.u32 %s105, %s106
      %p108 = scmp.eq.s32.totalorder %s107, 0
      %s110 = sadd.s32 %s109, 1
      %s111 = scalar_select %p108, %s109, %s110
      %p114 = pneg %p108
      %p115 = scmp.eq.s32.totalorder %s15, 3
      %p116 = por %p114, %p115
      %p117 = scmp.ne.s32.totalorder %s109, %s112
      %p118 = scmp.eq.s32.totalorder %s15, 0
      %p119 = por %p117, %p118
      %p120 = scmp.ne.s32.totalorder %s109, %s112
      %p121 = scmp.eq.s32.totalorder %s20, 3
      %p122 = por %p120, %p121
      %p123 = scmp.ne.s32.totalorder %s112, %s113
      %p124 = scmp.eq.s32.totalorder %s20, 0
      %p125 = por %p123, %p124
      %p126 = scmp.ne.s32.totalorder %s112, %s113
      %p127 = scmp.eq.s32.totalorder %s21, 3
      %p128 = por %p126, %p127
      %p130 = scmp.ne.s32.totalorder %s113, %s129
      %p131 = scmp.eq.s32.totalorder %s21, 0
      %p132 = por %p130, %p131
      %p133 = scmp.le.s32.totalorder 1, %s15
      %p134 = scmp.lt.s32.totalorder %s15, 5
      %p135 = pnand %p133, %p134
      %p136 = pneg %p135
      // Predicated region
      $region9: #{tpu_custom_call.1} parent=5 // pred_check
        _
      $region10: #{tpu_custom_call.1} parent=5 // pred_check_branch
        %138 = sbr.rel (%p135) target = $region12
      $region11: #{tpu_custom_call.1} parent=5 // pred_region
        %s139 = ssub.s32 %s15, 1
        // Predicated region
        $region13: #{tpu_custom_call.1} parent=11 // pred_check
          %p140 = pneg %p76
        $region14: #{tpu_custom_call.1} parent=11 // pred_check_branch
          %142 = sbr.rel (%p140) target = $region16
        $region15: #{tpu_custom_call.1} parent=11 // pred_region
          _
        $region16: #{tpu_custom_call.1} parent=11 // pred_fallthru
          _
        // Predicated region
        $region17: #{tpu_custom_call.1} parent=11 // pred_check
          %p143 = pneg %p97
        $region18: #{tpu_custom_call.1} parent=11 // pred_check_branch
          %145 = sbr.rel (%p143) target = $region20
        $region19: #{tpu_custom_call.1} parent=11 // pred_region
          _
        $region20: #{tpu_custom_call.1} parent=11 // pred_fallthru
          _
      $region12: #{tpu_custom_call.1} parent=5 // pred_fallthru
        _
      %p146 = scmp.lt.s32.totalorder %s15, 4
      // Predicated region
      $region21: #{tpu_custom_call.1} parent=5 // pred_check
        %p147 = pneg %p146
      $region22: #{tpu_custom_call.1} parent=5 // pred_check_branch
        %149 = sbr.rel (%p147) target = $region24
      $region23: #{tpu_custom_call.1} parent=5 // pred_region
        // Predicated region
        $region25: #{tpu_custom_call.1} parent=23 // pred_check
          %p150 = pneg %p49
        $region26: #{tpu_custom_call.1} parent=23 // pred_check_branch
          %152 = sbr.rel (%p150) target = $region28
        $region27: #{tpu_custom_call.1} parent=23 // pred_region
          %s153 = sand.u32 %s39, 1
          %s154 = scalar_lea.sflag [#allocation3], %s153
          %s155 = sand.u32 %s39, 1
          %s156 = smul.addr %s155, 4
          %s157 = scalar_lea.vmem [#allocation2], %s156
          %s159 = ssub.s32 64, 64
          %160 = vsyncadd %s154, %s159
          %s161 = smul.addr %s22, 2
          %s162 = sadd.s32 %s23, %s161
          %s163 = smul.addr %s162, 64
          %s164 = scalar_lea.hbm %s0, %s163
          %s166 = sshll.u32 %s157, 4
          %s167 = int_to_ptr.vmem [resolvable:$true] %s166
          %169 = dma.hbm_to_vmem [thread:$0]  %s164, 64, %s167, %s154
        $region28: #{tpu_custom_call.1} parent=23 // pred_fallthru
          _
      $region24: #{tpu_custom_call.1} parent=5 // pred_fallthru
        _
      %p170 = scmp.le.s32.totalorder 1, %s15
      %p171 = scmp.lt.s32.totalorder %s15, 5
      %p172 = pnand %p170, %p171
      %p173 = pneg %p172
      // Predicated region
      $region29: #{tpu_custom_call.1} parent=5 // pred_check
        _
      $region30: #{tpu_custom_call.1} parent=5 // pred_check_branch
        %175 = sbr.rel (%p172) target = $region32
      $region31: #{tpu_custom_call.1} parent=5 // pred_region
        %s176 = ssub.s32 %s15, 1
        %s177 = sand.u32 %s42, 1
        %s178 = scalar_lea.sflag [#allocation3], %s177
        %s179 = sand.u32 %s42, 1
        %s180 = smul.addr %s179, 4
        %s181 = scalar_lea.vmem [#allocation2], %s180
        // Predicated region
        $region33: #{tpu_custom_call.1} parent=31 // pred_check
          %p182 = pneg %p55
        $region34: #{tpu_custom_call.1} parent=31 // pred_check_branch
          %184 = sbr.rel (%p182) target = $region36
        $region35: #{tpu_custom_call.1} parent=31 // pred_region
          %185 = dma.done %s178, 64
        $region36: #{tpu_custom_call.1} parent=31 // pred_fallthru
          _
        %s186 = sand.u32 %s42, 1
        %s187 = scalar_lea.sflag [#allocation3], %s186
        %s188 = sand.u32 %s42, 1
        %s189 = smul.addr %s188, 4
        %s190 = scalar_lea.vmem [#allocation2], %s189
        %p191 = pneg %p55
        %p192 = pneg %p52
        %p193 = pneg %p76
        %p194 = pneg %p73
        %p195 = pneg %p97
        %p196 = pneg %p94
        %p197 = pneg %p125
        %p198 = pneg %p122
        %s199 = sand.u32 %s112, 1
        %s200 = scalar_lea.sflag [#allocation4], %s199
        %s201 = sand.u32 %s112, 1
        %s202 = smul.addr %s201, 4
        %s203 = scalar_lea.vmem [#allocation5], %s202
        %v204 = vld [vmem:[%s181] sm:$0xf]
        %vm205 = vcmask 1043456
        %v206 = vsel %vm205, %v204, 0.0
        %v207 = vrot.slane %v206, 4
        %v208 = vadd.f32 %v206, %v207
        %v209 = vrot.slane %v208, 2
        %v210 = vadd.f32 %v208, %v209
        %v211 = vrot.slane %v210, 1
        %v212 = vadd.f32 %v210, %v211
        %v213 = vrcp.pop 4.0
        %v214 = vmul.f32 %v212, %v213
        %v215 = vmul.f32 %v204, %v204
        %v216 = vsel %vm205, %v215, 0.0
        %v217 = vrot.slane %v216, 4
        %v218 = vadd.f32 %v216, %v217
        %v219 = vrot.slane %v218, 2
        %v220 = vadd.f32 %v218, %v219
        %v221 = vrot.slane %v220, 1
        %v222 = vadd.f32 %v220, %v221
        %v223 = vmul.f32 %v222, %v213
        %v224 = vmul.f32 %v214, %v214
        %v225 = vsub.f32 %v223, %v224
        %v226 = vadd.f32 %v225, 1e-06
        %v227 = vrsqrt.pop %v226
        %v228 = vld [vmem:[%s1] sm:$0xf]
        %v229 = vld [vmem:[%s2] sm:$0xf]
        %v230 = vsub.f32 %v204, %v214
        %v231 = vmul.f32 %v230, %v227
        %233 = vset.pattern.permute.xlu0 0
        %234 = vperm.xlu0 %233, %v228
        %v235 = vpop.permute.xlu0 %234
        %v237 = vmul.f32 %v231, %v235
        %239 = vset.pattern.permute.xlu0 0
        %240 = vperm.xlu0 %239, %v229
        %v241 = vpop.permute.xlu0 %240
        %v243 = vadd.f32 %v237, %v241
        %244 = vst [vmem:[%s203] sm:$0xf] %v243
        %s245 = sand.u32 %s112, 1
        %s246 = scalar_lea.sflag [#allocation4], %s245
        %s247 = sand.u32 %s112, 1
        %s248 = smul.addr %s247, 4
        %s249 = scalar_lea.vmem [#allocation5], %s248
        // Predicated region
        $region37: #{tpu_custom_call.1} parent=31 // pred_check
          %p250 = pneg %p122
        $region38: #{tpu_custom_call.1} parent=31 // pred_check_branch
          %252 = sbr.rel (%p250) target = $region40
        $region39: #{tpu_custom_call.1} parent=31 // pred_region
          %s254 = ssub.s32 64, 64
          %255 = vsyncadd %s246, %s254
          %s256 = smul.addr %s24, 2
          %s257 = sadd.s32 %s25, %s256
          %s258 = smul.addr %s257, 64
          %s259 = scalar_lea.hbm %s3, %s258
          %s261 = sshll.u32 %s249, 4
          %s262 = int_to_ptr.vmem [resolvable:$true] %s261
          %264 = dma.vmem_to_hbm [thread:$0]  %s262, 64, %s259, %s246
        $region40: #{tpu_custom_call.1} parent=31 // pred_fallthru
          _
      $region32: #{tpu_custom_call.1} parent=5 // pred_fallthru
        _
      %p265 = scmp.le.s32.totalorder 2, %s15
      // Predicated region
      $region41: #{tpu_custom_call.1} parent=5 // pred_check
        %p266 = pneg %p265
      $region42: #{tpu_custom_call.1} parent=5 // pred_check_branch
        %268 = sbr.rel (%p266) target = $region44
      $region43: #{tpu_custom_call.1} parent=5 // pred_region
        %s269 = ssub.s32 %s15, 2
        // Predicated region
        $region45: #{tpu_custom_call.1} parent=43 // pred_check
          %p270 = pneg %p128
        $region46: #{tpu_custom_call.1} parent=43 // pred_check_branch
          %272 = sbr.rel (%p270) target = $region48
        $region47: #{tpu_custom_call.1} parent=43 // pred_region
          %s273 = sand.u32 %s113, 1
          %s274 = scalar_lea.sflag [#allocation4], %s273
          %s275 = sand.u32 %s113, 1
          %s276 = smul.addr %s275, 4
          %s277 = scalar_lea.vmem [#allocation5], %s276
          %278 = dma.done %s274, 64
        $region48: #{tpu_custom_call.1} parent=43 // pred_fallthru
          _
      $region44: #{tpu_custom_call.1} parent=5 // pred_fallthru
        _
    $region6: #{tpu_custom_call.1} parent=1 // loop_footer
      %s19 = sadd.s32 1, %s15
    $region7: #{tpu_custom_call.1} parent=1 // loop_footer_branch
      %14 = sbr.rel target = $region3
    $region8: #{tpu_custom_call.1} parent=1 // loop_exit
      _
    %279 = vsyncpa [#allocation3], 1
    %s280 = scalar_lea.sflag [#allocation3], 1
    %281 = vsyncpa %s280, 1
    %282 = vsyncpa [#allocation4], 1
    %s283 = scalar_lea.sflag [#allocation4], 1
    %284 = vsyncpa %s283, 1

</llo_original>
